<compile_context>
chip_gen: v7x
topology: tpu7x:2x2x1
jax: 0.10.0
libtpu: 0.0.40
codegen_flags: <defaults>
</compile_context>

<pallas_src>
import jax
import jax.numpy as jnp
from jax.experimental import pallas as pl
from jax.experimental.pallas import tpu as pltpu

NUM_FEATURES = 28
OUTPUT_DIM = 4


def _round_up(n, m):
    return (n + m - 1) // m * m


def net_kernel(x_ref, w0_ref, b0_ref, w1_ref, b1_ref, w2_ref, b2_ref, o_ref):
    # bf16 cast in-kernel (VPU op hidden under the HBM DMA) instead of a
    # separate, un-hidden wrapper-side XLA pass.
    x = x_ref[...].astype(jnp.bfloat16)                               # [TB, 28]

    # dense0 + ReLU (bf16 MXU inputs, f32 accumulate / bias)
    h0 = jnp.dot(x, w0_ref[...], preferred_element_type=jnp.float32) + b0_ref[...]
    h0 = jnp.maximum(h0, 0.0)                                         # [TB, H] f32

    # Dropout(0.1): identity in eval mode.
    # TODO(synk): training-mode dropout would need pltpu.prng_seed/prng_random_bits.

    # dense1 + ReLU
    h1 = jnp.dot(h0.astype(jnp.bfloat16), w1_ref[...],
                 preferred_element_type=jnp.float32) + b1_ref[...]
    h1 = jnp.maximum(h1, 0.0)                                         # [TB, 4] f32

    # output layer + softmax over the (4-wide) last dim
    z = jnp.dot(h1.astype(jnp.bfloat16), w2_ref[...],
                preferred_element_type=jnp.float32) + b2_ref[...]     # [TB, 4] f32
    z = z - jnp.max(z, axis=-1, keepdims=True)
    e = jnp.exp(z)
    # approx=True -> EUP slot; rows sum to 1 within ~1e-3 (tolerated below).
    inv = pl.reciprocal(jnp.sum(e, axis=-1, keepdims=True), approx=True)
    o_ref[...] = (e * inv).astype(o_ref.dtype)                        # [TB, 4] f32


def init_params(key, num_neurons):
    """PyTorch-style uniform(-1/sqrt(fan_in), 1/sqrt(fan_in)) init.

    Weights stored transposed ([in, out]) so the kernel computes x @ W + b
    (== PyTorch's x @ W.T + b with W=[out, in]); biases as [1, out]."""
    k0, k1, k2, k3, k4, k5 = jax.random.split(key, 6)

    def u(k, shape, fan_in):
        bound = 1.0 / jnp.sqrt(jnp.float32(fan_in))
        return jax.random.uniform(k, shape, jnp.float32, -bound, bound)

    return {
        "w0": u(k0, (NUM_FEATURES, num_neurons), NUM_FEATURES),
        "b0": u(k1, (1, num_neurons), NUM_FEATURES),
        "w1": u(k2, (num_neurons, OUTPUT_DIM), num_neurons),
        "b1": u(k3, (1, OUTPUT_DIM), num_neurons),
        "w2": u(k4, (OUTPUT_DIM, OUTPUT_DIM), OUTPUT_DIM),
        "b2": u(k5, (1, OUTPUT_DIM), OUTPUT_DIM),
    }


def prepare_kernel_params(params):
    """Cast matmul weights to bf16 (MXU inputs); keep biases f32 for the epilogue."""
    bf = jnp.bfloat16
    return {
        "w0": params["w0"].astype(bf),
        "b0": params["b0"].astype(jnp.float32),
        "w1": params["w1"].astype(bf),
        "b1": params["b1"].astype(jnp.float32),
        "w2": params["w2"].astype(bf),
        "b2": params["b2"].astype(jnp.float32),
    }


def net_forward(x, kp, *, block_b=8192):
    """x: [B, NUM_FEATURES] float32 (unpadded). kp: output of prepare_kernel_params."""
    B = x.shape[0]
    H = kp["w0"].shape[1]

    # Batch tile: multiple of 8 sublanes, as large as block_b (amortizes the
    # ~0.35 us per-grid-step overhead).  Cap it so the "parallel" batch axis has
    # >= 2 grid steps when B allows -- on v7x that lets both TensorCores run.
    tb = min(block_b, _round_up(B, 8))
    if pl.cdiv(B, tb) < 2 and B >= 16:
        tb = _round_up(pl.cdiv(B, 2), 8)
    grid = (pl.cdiv(B, tb),)   # ragged last tile handled by Pallas block masking

    # Weights/biases: constant index_map -> stay resident in VMEM across the grid.
    def wspec(shape):
        return pl.BlockSpec(shape, lambda i: (0, 0))

    flops = 2 * B * (NUM_FEATURES * H + H * OUTPUT_DIM + OUTPUT_DIM * OUTPUT_DIM)
    param_bytes = sum(int(v.size) * v.dtype.itemsize for v in kp.values())
    bytes_accessed = (x.size * x.dtype.itemsize          # f32 x read
                      + param_bytes                       # weights/biases
                      + B * OUTPUT_DIM * 4)               # (B, 4) f32 output write

    return pl.pallas_call(
        net_kernel,
        out_shape=jax.ShapeDtypeStruct((B, OUTPUT_DIM), jnp.float32),
        grid=grid,
        in_specs=[
            pl.BlockSpec((tb, NUM_FEATURES), lambda i: (i, 0)),   # x tile (f32)
            wspec((NUM_FEATURES, H)),                             # w0 (bf16)
            wspec((1, H)),                                        # b0 (f32)
            wspec((H, OUTPUT_DIM)),                               # w1 (bf16)
            wspec((1, OUTPUT_DIM)),                               # b1 (f32)
            wspec((OUTPUT_DIM, OUTPUT_DIM)),                      # w2 (bf16)
            wspec((1, OUTPUT_DIM)),                               # b2 (f32)
        ],
        out_specs=pl.BlockSpec((tb, OUTPUT_DIM), lambda i: (i, 0)),
        compiler_params=pltpu.CompilerParams(
            dimension_semantics=("parallel",)),
        cost_estimate=pl.CostEstimate(
            flops=flops,
            transcendentals=B * (OUTPUT_DIM + 1),    # exp lanes + reciprocal
            bytes_accessed=bytes_accessed),
    )(x, kp["w0"], kp["b0"], kp["w1"], kp["b1"], kp["w2"], kp["b2"])


def net_reference_f32(x, p):
    """Pure-f32 JAX reference of the same forward pass (eval mode)."""
    h0 = jnp.maximum(x @ p["w0"] + p["b0"], 0.0)
    h1 = jnp.maximum(h0 @ p["w1"] + p["b1"], 0.0)
    z = h1 @ p["w2"] + p["b2"]
    return jax.nn.softmax(z, axis=-1)


def net_reference_bf16(x, p):
    """Reference emulating the kernel's bf16-matmul / f32-accumulate math."""
    bf = jnp.bfloat16
    h0 = jnp.maximum(
        jnp.dot(x.astype(bf), p["w0"].astype(bf),
                preferred_element_type=jnp.float32) + p["b0"], 0.0)
    h1 = jnp.maximum(
        jnp.dot(h0.astype(bf), p["w1"].astype(bf),
                preferred_element_type=jnp.float32) + p["b1"], 0.0)
    z = jnp.dot(h1.astype(bf), p["w2"].astype(bf),
                preferred_element_type=jnp.float32) + p["b2"]
    return jax.nn.softmax(z, axis=-1)


if __name__ == "__main__":
    NUM_NEURONS = 32

    key = jax.random.PRNGKey(0)
    k_params, k_x1, k_x2 = jax.random.split(key, 3)
    params = init_params(k_params, NUM_NEURONS)
    kparams = prepare_kernel_params(params)

    # --- Small demo batch (single grid step) ---
    B = 8
    x = jax.random.normal(k_x1, (B, NUM_FEATURES), dtype=jnp.float32)
    out = jax.block_until_ready(net_forward(x, kparams))
    assert out.shape == (B, OUTPUT_DIM)

    # Tight check vs. a reference using the same bf16-input matmul math.
    ref_bf16 = net_reference_bf16(x, params)
    assert jnp.allclose(out, ref_bf16, atol=2e-3, rtol=2e-3), "mismatch vs bf16 reference"
    # Loose check vs. the full-f32 reference (bf16 weight/activation rounding).
    ref_f32 = net_reference_f32(x, params)
    assert jnp.allclose(out, ref_f32, atol=3e-2), "mismatch vs f32 reference"
    # Softmax rows must sum to ~1 (approx reciprocal -> small tolerance).
    assert jnp.allclose(jnp.sum(out, axis=-1), 1.0, atol=1e-2)

    # --- Multi-step grid + ragged last tile (200 = 3*64 + 8) ---
    B2 = 200
    x2 = jax.random.normal(k_x2, (B2, NUM_FEATURES), dtype=jnp.float32)
    out2 = jax.block_until_ready(net_forward(x2, kparams, block_b=64))
    assert out2.shape == (B2, OUTPUT_DIM)
    assert jnp.allclose(out2, net_reference_bf16(x2, params), atol=2e-3, rtol=2e-3), \
        "mismatch vs bf16 reference (ragged batch)"
    assert jnp.allclose(jnp.sum(out2, axis=-1), 1.0, atol=1e-2)

    print("KERNEL_OK")
</pallas_src>

<mosaic_0001>
module attributes {stable_mosaic.version = 11 : i64} {
  func.func @net_kernel(%arg0: i32, %arg1: memref<8x28xf32, #tpu.memory_space<vmem>>, %arg2: memref<28x32xbf16, #tpu.memory_space<vmem>>, %arg3: memref<1x32xf32, #tpu.memory_space<vmem>>, %arg4: memref<32x4xbf16, #tpu.memory_space<vmem>>, %arg5: memref<1x4xf32, #tpu.memory_space<vmem>>, %arg6: memref<4x4xbf16, #tpu.memory_space<vmem>>, %arg7: memref<1x4xf32, #tpu.memory_space<vmem>>, %arg8: memref<8x4xf32, #tpu.memory_space<vmem>>) attributes {dimension_semantics = [#tpu.dimension_semantics<parallel>], iteration_bounds = array<i64: 1>, scalar_prefetch = 0 : i64, scratch_operands = 0 : i64, tpu.core_type = #tpu.core_type<tc>, window_params = [{transform_indices = @transform_0, window_bounds = array<i64: 8, 28>}, {pipeline_mode = #tpu.pipeline_mode<synchronous>, transform_indices = @transform_1, window_bounds = array<i64: 28, 32>}, {pipeline_mode = #tpu.pipeline_mode<synchronous>, transform_indices = @transform_2, window_bounds = array<i64: 1, 32>}, {pipeline_mode = #tpu.pipeline_mode<synchronous>, transform_indices = @transform_3, window_bounds = array<i64: 32, 4>}, {pipeline_mode = #tpu.pipeline_mode<synchronous>, transform_indices = @transform_4, window_bounds = array<i64: 1, 4>}, {pipeline_mode = #tpu.pipeline_mode<synchronous>, transform_indices = @transform_5, window_bounds = array<i64: 4, 4>}, {pipeline_mode = #tpu.pipeline_mode<synchronous>, transform_indices = @transform_6, window_bounds = array<i64: 1, 4>}, {transform_indices = @transform_7, window_bounds = array<i64: 8, 4>}]} {
    %c0 = arith.constant 0 : index
    %c0_0 = arith.constant 0 : index
    %0 = vector.load %arg1[%c0, %c0_0] : memref<8x28xf32, #tpu.memory_space<vmem>>, vector<8x28xf32>
    %1 = arith.truncf %0 : vector<8x28xf32> to vector<8x28xbf16>
    %c0_1 = arith.constant 0 : index
    %c0_2 = arith.constant 0 : index
    %2 = vector.load %arg2[%c0_1, %c0_2] : memref<28x32xbf16, #tpu.memory_space<vmem>>, vector<28x32xbf16>
    %cst = arith.constant dense<0.000000e+00> : vector<8x32xf32>
    %3 = tpu.matmul %1, %2, %cst {dimension_numbers = #tpu.dot_dimension_numbers<[1], [0], [0], [1], [0, 0, 1, 1], [], []>} : vector<8x28xbf16>, vector<28x32xbf16>, vector<8x32xf32> -> vector<8x32xf32>
    %c0_3 = arith.constant 0 : index
    %c0_4 = arith.constant 0 : index
    %4 = vector.load %arg3[%c0_3, %c0_4] : memref<1x32xf32, #tpu.memory_space<vmem>>, vector<1x32xf32>
    %5 = vector.broadcast %4 : vector<1x32xf32> to vector<8x32xf32>
    %6 = arith.addf %3, %5 : vector<8x32xf32>
    %cst_5 = arith.constant 0.000000e+00 : f32
    %7 = vector.broadcast %cst_5 : f32 to vector<8x32xf32>
    %8 = arith.maximumf %6, %7 : vector<8x32xf32>
    %9 = arith.truncf %8 : vector<8x32xf32> to vector<8x32xbf16>
    %c0_6 = arith.constant 0 : index
    %c0_7 = arith.constant 0 : index
    %10 = vector.load %arg4[%c0_6, %c0_7] : memref<32x4xbf16, #tpu.memory_space<vmem>>, vector<32x4xbf16>
    %cst_8 = arith.constant dense<0.000000e+00> : vector<8x4xf32>
    %11 = tpu.matmul %9, %10, %cst_8 {dimension_numbers = #tpu.dot_dimension_numbers<[1], [0], [0], [1], [0, 0, 1, 1], [], []>} : vector<8x32xbf16>, vector<32x4xbf16>, vector<8x4xf32> -> vector<8x4xf32>
    %c0_9 = arith.constant 0 : index
    %c0_10 = arith.constant 0 : index
    %12 = vector.load %arg5[%c0_9, %c0_10] : memref<1x4xf32, #tpu.memory_space<vmem>>, vector<1x4xf32>
    %13 = vector.broadcast %12 : vector<1x4xf32> to vector<8x4xf32>
    %14 = arith.addf %11, %13 : vector<8x4xf32>
    %cst_11 = arith.constant 0.000000e+00 : f32
    %15 = vector.broadcast %cst_11 : f32 to vector<8x4xf32>
    %16 = arith.maximumf %14, %15 : vector<8x4xf32>
    %17 = arith.truncf %16 : vector<8x4xf32> to vector<8x4xbf16>
    %c0_12 = arith.constant 0 : index
    %c0_13 = arith.constant 0 : index
    %18 = vector.load %arg6[%c0_12, %c0_13] : memref<4x4xbf16, #tpu.memory_space<vmem>>, vector<4x4xbf16>
    %cst_14 = arith.constant dense<0.000000e+00> : vector<8x4xf32>
    %19 = tpu.matmul %17, %18, %cst_14 {dimension_numbers = #tpu.dot_dimension_numbers<[1], [0], [0], [1], [0, 0, 1, 1], [], []>} : vector<8x4xbf16>, vector<4x4xbf16>, vector<8x4xf32> -> vector<8x4xf32>
    %c0_15 = arith.constant 0 : index
    %c0_16 = arith.constant 0 : index
    %20 = vector.load %arg7[%c0_15, %c0_16] : memref<1x4xf32, #tpu.memory_space<vmem>>, vector<1x4xf32>
    %21 = vector.broadcast %20 : vector<1x4xf32> to vector<8x4xf32>
    %22 = arith.addf %19, %21 : vector<8x4xf32>
    %cst_17 = arith.constant dense<0xFF800000> : vector<8xf32>
    %23 = vector.multi_reduction <maximumf>, %22, %cst_17 [1] : vector<8x4xf32> to vector<8xf32>
    %24 = vector.shape_cast %23 : vector<8xf32> to vector<8x1xf32>
    %25 = vector.broadcast %24 : vector<8x1xf32> to vector<8x4xf32>
    %26 = arith.subf %22, %25 : vector<8x4xf32>
    %27 = math.exp %26 : vector<8x4xf32>
    %cst_18 = arith.constant dense<0.000000e+00> : vector<8xf32>
    %28 = vector.multi_reduction <add>, %27, %cst_18 [1] : vector<8x4xf32> to vector<8xf32>
    %29 = vector.shape_cast %28 : vector<8xf32> to vector<8x1xf32>
    %30 = tpu.reciprocal %29 {approx = true} : vector<8x1xf32> -> vector<8x1xf32>
    %31 = vector.broadcast %30 : vector<8x1xf32> to vector<8x4xf32>
    %32 = arith.mulf %27, %31 : vector<8x4xf32>
    %c0_19 = arith.constant 0 : index
    %c0_20 = arith.constant 0 : index
    %33 = vector.load %arg8[%c0_19, %c0_20] : memref<8x4xf32, #tpu.memory_space<vmem>>, vector<8x4xf32>
    tpu.vector_store %arg8[%c0_19, %c0_20], %32 {strides = array<i32>} : memref<8x4xf32, #tpu.memory_space<vmem>>, vector<8x4xf32>,
    return
  }
  func.func @transform_0(%arg0: i32) -> (i32, i32) {
    %c0_i32 = arith.constant 0 : i32
    %c0_i32_0 = arith.constant 0 : i32
    return %arg0, %c0_i32 : i32, i32
  }
  func.func @transform_1(%arg0: i32) -> (i32, i32) {
    %c0_i32 = arith.constant 0 : i32
    %c0_i32_0 = arith.constant 0 : i32
    %c0_i32_1 = arith.constant 0 : i32
    return %c0_i32, %c0_i32_0 : i32, i32
  }
  func.func @transform_2(%arg0: i32) -> (i32, i32) {
    %c0_i32 = arith.constant 0 : i32
    %c0_i32_0 = arith.constant 0 : i32
    %c0_i32_1 = arith.constant 0 : i32
    return %c0_i32, %c0_i32_0 : i32, i32
  }
  func.func @transform_3(%arg0: i32) -> (i32, i32) {
    %c0_i32 = arith.constant 0 : i32
    %c0_i32_0 = arith.constant 0 : i32
    %c0_i32_1 = arith.constant 0 : i32
    return %c0_i32, %c0_i32_0 : i32, i32
  }
  func.func @transform_4(%arg0: i32) -> (i32, i32) {
    %c0_i32 = arith.constant 0 : i32
    %c0_i32_0 = arith.constant 0 : i32
    %c0_i32_1 = arith.constant 0 : i32
    return %c0_i32, %c0_i32_0 : i32, i32
  }
  func.func @transform_5(%arg0: i32) -> (i32, i32) {
    %c0_i32 = arith.constant 0 : i32
    %c0_i32_0 = arith.constant 0 : i32
    %c0_i32_1 = arith.constant 0 : i32
    return %c0_i32, %c0_i32_0 : i32, i32
  }
  func.func @transform_6(%arg0: i32) -> (i32, i32) {
    %c0_i32 = arith.constant 0 : i32
    %c0_i32_0 = arith.constant 0 : i32
    %c0_i32_1 = arith.constant 0 : i32
    return %c0_i32, %c0_i32_0 : i32, i32
  }
  func.func @transform_7(%arg0: i32) -> (i32, i32) {
    %c0_i32 = arith.constant 0 : i32
    %c0_i32_0 = arith.constant 0 : i32
    return %arg0, %c0_i32 : i32, i32
  }
}

</mosaic_0001>

<llo_original>
// kernel: tpu_custom_call.1
$region0: #{tpu_custom_call.1}
  #allocation0 [shape = 'u32[]', space=smem, size = 0x4, offset = 0x4, fixed_abs, tag = 'smem constant byte address 0x4 - core index']
  #allocation1 [shape = 'u32[144,128]{1,0:T(1,128)}', space=vmem, size = 0x12000, scoped, tag = 'internal scratch']
  %s0 = inlined_call_operand.hbm [shape: f32[8,28], index: 0, kind: input, shape index: {}]
  %s1 = inlined_call_operand.vmem [shape: bf16[28,32], index: 1, kind: input, shape index: {}]
  %s2 = inlined_call_operand.vmem [shape: f32[1,32], index: 2, kind: input, shape index: {}]
  %s3 = inlined_call_operand.vmem [shape: bf16[32,4], index: 3, kind: input, shape index: {}]
  %s4 = inlined_call_operand.vmem [shape: f32[1,4], index: 4, kind: input, shape index: {}]
  %s5 = inlined_call_operand.vmem [shape: bf16[4,4], index: 5, kind: input, shape index: {}]
  %s6 = inlined_call_operand.vmem [shape: f32[1,4], index: 6, kind: input, shape index: {}]
  %s7 = inlined_call_operand.vmem [shape: f32[8,4], index: 7, kind: output, shape index: {}]
  %s8 = sld [smem:[#allocation0]]
  $region42: #{tpu_custom_call.1} parent=0
    _
  %s10 = ssub.s32 1, %s8
  %s11 = scalar_select 0, %s10, %s8
  $region1: #{tpu_custom_call.1} parent=0
    #allocation2 [shape = 'u8[4096]{0}', space=vmem, size = 0x1000, scoped, tag = 'input window, operand 0, single buffered']
    #allocation3 [shape = 's32[1]{0}', space=sflag, size = 0x4, scoped, tag = 'scoped memory for tpu_custom_call.1']
    %12 = vsyncpa [#allocation3], 0
    // Predicated region
    $region2: #{tpu_custom_call.1} parent=1 // pred_check
      _
    $region3: #{tpu_custom_call.1} parent=1 // pred_check_branch
      %14 = sbr.rel (0) target = $region5
    $region4: #{tpu_custom_call.1} parent=1 // pred_region
      %s16 = ssub.s32 128, 128
      %17 = vsyncadd [#allocation3], %s16
      %s19 = sshll.u32 [#allocation2], 4
      %s20 = int_to_ptr.vmem [resolvable:$true] %s19
      %22 = dma.hbm_to_vmem [thread:$0]  %s0, 128, %s20, [#allocation3]
    $region5: #{tpu_custom_call.1} parent=1 // pred_fallthru
      _
    // Predicated region
    $region6: #{tpu_custom_call.1} parent=1 // pred_check
      _
    $region7: #{tpu_custom_call.1} parent=1 // pred_check_branch
      %24 = sbr.rel (0) target = $region9
    $region8: #{tpu_custom_call.1} parent=1 // pred_region
      _
    $region9: #{tpu_custom_call.1} parent=1 // pred_fallthru
      _
    // Predicated region
    $region10: #{tpu_custom_call.1} parent=1 // pred_check
      _
    $region11: #{tpu_custom_call.1} parent=1 // pred_check_branch
      %26 = sbr.rel (0) target = $region13
    $region12: #{tpu_custom_call.1} parent=1 // pred_region
      _
    $region13: #{tpu_custom_call.1} parent=1 // pred_fallthru
      _
    // Predicated region
    $region14: #{tpu_custom_call.1} parent=1 // pred_check
      _
    $region15: #{tpu_custom_call.1} parent=1 // pred_check_branch
      %28 = sbr.rel (0) target = $region17
    $region16: #{tpu_custom_call.1} parent=1 // pred_region
      _
    $region17: #{tpu_custom_call.1} parent=1 // pred_fallthru
      _
    // Predicated region
    $region18: #{tpu_custom_call.1} parent=1 // pred_check
      _
    $region19: #{tpu_custom_call.1} parent=1 // pred_check_branch
      %30 = sbr.rel (0) target = $region21
    $region20: #{tpu_custom_call.1} parent=1 // pred_region
      _
    $region21: #{tpu_custom_call.1} parent=1 // pred_fallthru
      _
    // Predicated region
    $region22: #{tpu_custom_call.1} parent=1 // pred_check
      _
    $region23: #{tpu_custom_call.1} parent=1 // pred_check_branch
      %32 = sbr.rel (0) target = $region25
    $region24: #{tpu_custom_call.1} parent=1 // pred_region
      _
    $region25: #{tpu_custom_call.1} parent=1 // pred_fallthru
      _
    // Predicated region
    $region26: #{tpu_custom_call.1} parent=1 // pred_check
      _
    $region27: #{tpu_custom_call.1} parent=1 // pred_check_branch
      %34 = sbr.rel (0) target = $region29
    $region28: #{tpu_custom_call.1} parent=1 // pred_region
      _
    $region29: #{tpu_custom_call.1} parent=1 // pred_fallthru
      _
    // Predicated region
    $region30: #{tpu_custom_call.1} parent=1 // pred_check
      _
    $region31: #{tpu_custom_call.1} parent=1 // pred_check_branch
      %36 = sbr.rel (0) target = $region33
    $region32: #{tpu_custom_call.1} parent=1 // pred_region
      %37 = dma.done [#allocation3], 128
    $region33: #{tpu_custom_call.1} parent=1 // pred_fallthru
      _
    %v39 = vld [vmem:[#allocation2] sm:$0xff]
    %v40 = vpack.c.bf16 %v39, %v39
    %v41 = vld [vmem:[%s1] sm:$0xf]
    %v42 = vld [vmem:[%s1 + $0x4] sm:$0xf]
    %v43 = vld [vmem:[%s1 + $0x8] sm:$0xf]
    %v44 = vld [vmem:[%s1 + $0xc] sm:$0x3]
    %v45 = vld [vmem:[%s2] sm:$0x1]
    %v47 = vlaneseq
    %v48 = vshrl.u32 %v47, 7
    %v49 = vsub.s32 0, %v48
    %v50 = vrot.slane %v45, %v49
    %v56 = vunpack.c.l.b16 %v41
    %v57 = vunpack.c.l.b16 %v42
    %v58 = vunpack.c.l.b16 %v43
    %v59 = vunpack.c.l.b16 %v44
    %v60 = vpack.c.b16 %v57, %v56
    %v61 = vpack.c.b16 %v59, %v58
    %vm63 = vcmask 228352
    %v65 = vsel %vm63, %v40, 0
    %vm67 = vcmask 1045504
    %v69 = vsel %vm67, %v61, 0
    %71 = vmatprep.subr.bf16.mxu0 0
    %72 = vmatpush1.bf16.msra.mxu0 %v60
    %73 = vmatprep.subr.bf16.mxu0 0
    %74 = vmatpush1.bf16.msra.mxu0 %v69
    %75 = vmatprep.subr.bf16.mxu0 0
    %76 = vmatpush1.bf16.msra.mxu0 0
    %77 = vmatprep.subr.bf16.mxu0 0
    %78 = vmatpush1.bf16.msra.mxu0 0
    %79 = vmatprep.subr.bf16.mxu0 0
    %80 = vmatpush1.bf16.msra.mxu0 0
    %81 = vmatprep.subr.bf16.mxu0 0
    %82 = vmatpush1.bf16.msra.mxu0 0
    %83 = vmatprep.subr.bf16.mxu0 0
    %84 = vmatpush1.bf16.msra.mxu0 0
    %85 = vmatprep.subr.bf16.mxu0 0
    %86 = vmatpush1.bf16.msra.mxu0 0
    %87 = vmatprep.subr.bf16.mxu0 0
    %88 = vmatpush1.bf16.msra.mxu0 0
    %89 = vmatprep.subr.bf16.mxu0 0
    %90 = vmatpush1.bf16.msra.mxu0 0
    %91 = vmatprep.subr.bf16.mxu0 0
    %92 = vmatpush1.bf16.msra.mxu0 0
    %93 = vmatprep.subr.bf16.mxu0 0
    %94 = vmatpush1.bf16.msra.mxu0 0
    %95 = vmatprep.subr.bf16.mxu0 0
    %96 = vmatpush1.bf16.msra.mxu0 0
    %97 = vmatprep.subr.bf16.mxu0 0
    %98 = vmatpush1.bf16.msra.mxu0 0
    %99 = vmatprep.subr.bf16.mxu0 0
    %100 = vmatpush1.bf16.msra.mxu0 0
    %101 = vmatprep.subr.bf16.mxu0 0
    %102 = vmatpush1.bf16.msra.mxu0 0
    %103 = vmatprep.mubr.bf16.mxu0 0
    %104 = vmatmul.mubr.bf16.gmra.mrb[0].mxu0 %v65
    %v105 = vpop.f32.mrb[0].mxu0
    %v106 = vadd.f32 %v50, %v105
    %v107 = vpop.f32.mrb[0].mxu0
    %v108 = vpop.f32.mrb[0].mxu0
    %v109 = vpop.f32.mrb[0].mxu0
    %110 = vdwg.mxu0
    %v111 = vmax.f32 %v106, 0.0
    %v112 = vpack.c.bf16 %v111, %v111
    %v113 = vld [vmem:[%s3] sm:$0xf]
    %v114 = vld [vmem:[%s3 + $0x4] sm:$0xf]
    %v115 = vld [vmem:[%s3 + $0x8] sm:$0xf]
    %v116 = vld [vmem:[%s3 + $0xc] sm:$0xf]
    %v117 = vld [vmem:[%s4] sm:$0x1]
    %v119 = vlaneseq
    %v120 = vshrl.u32 %v119, 7
    %v121 = vsub.s32 0, %v120
    %v122 = vrot.slane %v117, %v121
    %v128 = vunpack.c.l.b16 %v113
    %v129 = vunpack.c.l.b16 %v114
    %v130 = vunpack.c.l.b16 %v115
    %v131 = vunpack.c.l.b16 %v116
    %v132 = vpack.c.b16 %v129, %v128
    %v133 = vpack.c.b16 %v131, %v130
    %vm136 = vcmask 261120
    %v138 = vsel %vm136, %v112, 0
    %140 = vmatprep.subr.bf16.mxu0 0
    %141 = vmatpush1.bf16.msra.mxu0 %v132
    %142 = vmatprep.subr.bf16.mxu0 0
    %143 = vmatpush1.bf16.msra.mxu0 %v133
    %144 = vmatprep.subr.bf16.mxu0 0
    %145 = vmatpush1.bf16.msra.mxu0 0
    %146 = vmatprep.subr.bf16.mxu0 0
    %147 = vmatpush1.bf16.msra.mxu0 0
    %148 = vmatprep.subr.bf16.mxu0 0
    %149 = vmatpush1.bf16.msra.mxu0 0
    %150 = vmatprep.subr.bf16.mxu0 0
    %151 = vmatpush1.bf16.msra.mxu0 0
    %152 = vmatprep.subr.bf16.mxu0 0
    %153 = vmatpush1.bf16.msra.mxu0 0
    %154 = vmatprep.subr.bf16.mxu0 0
    %155 = vmatpush1.bf16.msra.mxu0 0
    %156 = vmatprep.subr.bf16.mxu0 0
    %157 = vmatpush1.bf16.msra.mxu0 0
    %158 = vmatprep.subr.bf16.mxu0 0
    %159 = vmatpush1.bf16.msra.mxu0 0
    %160 = vmatprep.subr.bf16.mxu0 0
    %161 = vmatpush1.bf16.msra.mxu0 0
    %162 = vmatprep.subr.bf16.mxu0 0
    %163 = vmatpush1.bf16.msra.mxu0 0
    %164 = vmatprep.subr.bf16.mxu0 0
    %165 = vmatpush1.bf16.msra.mxu0 0
    %166 = vmatprep.subr.bf16.mxu0 0
    %167 = vmatpush1.bf16.msra.mxu0 0
    %168 = vmatprep.subr.bf16.mxu0 0
    %169 = vmatpush1.bf16.msra.mxu0 0
    %170 = vmatprep.subr.bf16.mxu0 0
    %171 = vmatpush1.bf16.msra.mxu0 0
    %172 = vmatprep.mubr.bf16.mxu0 0
    %173 = vmatmul.mubr.bf16.gmra.mrb[0].mxu0 %v138
    %v174 = vpop.f32.mrb[0].mxu0
    %v175 = vadd.f32 %v122, %v174
    %v176 = vpop.f32.mrb[0].mxu0
    %v177 = vpop.f32.mrb[0].mxu0
    %v178 = vpop.f32.mrb[0].mxu0
    %179 = vdwg.mxu0
    %v180 = vmax.f32 %v175, 0.0
    %v181 = vpack.c.bf16 %v180, %v180
    %v182 = vld [vmem:[%s5] sm:$0x3]
    %v183 = vld [vmem:[%s6] sm:$0x1]
    %v185 = vlaneseq
    %v186 = vshrl.u32 %v185, 7
    %v187 = vsub.s32 0, %v186
    %v188 = vrot.slane %v183, %v187
    %vm190 = vcmask 31744
    %v192 = vsel %vm190, %v181, 0
    %vm194 = vcmask 1041408
    %v196 = vsel %vm194, %v182, 0
    %198 = vmatprep.subr.bf16.mxu0 0
    %199 = vmatpush1.bf16.msra.mxu0 %v196
    %200 = vmatprep.subr.bf16.mxu0 0
    %201 = vmatpush1.bf16.msra.mxu0 0
    %202 = vmatprep.subr.bf16.mxu0 0
    %203 = vmatpush1.bf16.msra.mxu0 0
    %204 = vmatprep.subr.bf16.mxu0 0
    %205 = vmatpush1.bf16.msra.mxu0 0
    %206 = vmatprep.subr.bf16.mxu0 0
    %207 = vmatpush1.bf16.msra.mxu0 0
    %208 = vmatprep.subr.bf16.mxu0 0
    %209 = vmatpush1.bf16.msra.mxu0 0
    %210 = vmatprep.subr.bf16.mxu0 0
    %211 = vmatpush1.bf16.msra.mxu0 0
    %212 = vmatprep.subr.bf16.mxu0 0
    %213 = vmatpush1.bf16.msra.mxu0 0
    %214 = vmatprep.subr.bf16.mxu0 0
    %215 = vmatpush1.bf16.msra.mxu0 0
    %216 = vmatprep.subr.bf16.mxu0 0
    %217 = vmatpush1.bf16.msra.mxu0 0
    %218 = vmatprep.subr.bf16.mxu0 0
    %219 = vmatpush1.bf16.msra.mxu0 0
    %220 = vmatprep.subr.bf16.mxu0 0
    %221 = vmatpush1.bf16.msra.mxu0 0
    %222 = vmatprep.subr.bf16.mxu0 0
    %223 = vmatpush1.bf16.msra.mxu0 0
    %224 = vmatprep.subr.bf16.mxu0 0
    %225 = vmatpush1.bf16.msra.mxu0 0
    %226 = vmatprep.subr.bf16.mxu0 0
    %227 = vmatpush1.bf16.msra.mxu0 0
    %228 = vmatprep.subr.bf16.mxu0 0
    %229 = vmatpush1.bf16.msra.mxu0 0
    %230 = vmatprep.mubr.bf16.mxu0 0
    %231 = vmatmul.mubr.bf16.gmra.mrb[0].mxu0 %v192
    %v232 = vpop.f32.mrb[0].mxu0
    %v233 = vadd.f32 %v188, %v232
    %v234 = vpop.f32.mrb[0].mxu0
    %v235 = vpop.f32.mrb[0].mxu0
    %v236 = vpop.f32.mrb[0].mxu0
    %237 = vdwg.mxu0
    %v238 = vsel %vm190, %v233, -inf
    %239 = vmax.xlane.f32.xlu0 %v238
    %v240 = vpop.xlane.xlu0 %239
    %v241 = vsub.f32 %v233, %v240
    %v242 = vmul.f32 %v241, 1.442695
    %v243 = vpow.pop %v242
    %v244 = vsel %vm190, %v243, 0.0
    %245 = vadd.xlane.f32.xlu0 %v244
    %v246 = vpop.xlane.xlu0 %245
    %v247 = vrcp.pop %v246
    %v248 = vmul.f32 %v243, %v247
    %249 = vst.msk [vmem:[%s7] sm:$0xff] %vm190, %v248
    // Predicated region
    $region34: #{tpu_custom_call.1} parent=1 // pred_check
      _
    $region35: #{tpu_custom_call.1} parent=1 // pred_check_branch
      %251 = sbr.rel (0) target = $region37
    $region36: #{tpu_custom_call.1} parent=1 // pred_region
      _
    $region37: #{tpu_custom_call.1} parent=1 // pred_fallthru
      _
    // Predicated region
    $region38: #{tpu_custom_call.1} parent=1 // pred_check
      _
    $region39: #{tpu_custom_call.1} parent=1 // pred_check_branch
      %253 = sbr.rel (0) target = $region41
    $region40: #{tpu_custom_call.1} parent=1 // pred_region
      _
    $region41: #{tpu_custom_call.1} parent=1 // pred_fallthru
      _
    %254 = vsyncpa [#allocation3], 1

</llo_original>
